<compile_context>
chip_gen: v7x
topology: tpu7x:2x2x1
jax: 0.10.0
libtpu: 0.0.40
codegen_flags: <defaults>
</compile_context>

<pallas_src>
import functools

import jax
import jax.numpy as jnp
from jax import lax
from jax.experimental import pallas as pl
from jax.experimental.pallas import tpu as pltpu

_LANE = 128        # lane-dense padding target (hidden dim and output dim)
_SUB_ROWS = 512    # inner row-chunk size for very large batch tiles
_ROW_ALIGN = 16    # bf16 sublane packing -> keep row counts multiples of 16


def _round_up(x, m):
    return (x + m - 1) // m * m


def _device_kind():
    try:
        return jax.devices()[0].device_kind.lower()
    except Exception:
        return ""


def _mlp_kernel(x_ref, w1_ref, w2_ref, w3_ref, wl_ref, out_ref, *,
                sub_rows, n_sub, compute_dtype, unroll):
    # NOTE: weights are intentionally NOT hoisted out of the chunk loop; the
    # padded 128x128 bf16 tiles would pin too many vregs. VMEM vld is cheap
    # and Mosaic keeps hot tiles resident on its own.
    def chunk(c):
        r0 = pl.multiple_of(c * sub_rows, sub_rows)
        x = x_ref[pl.ds(r0, sub_rows), :].astype(compute_dtype)
        h = jnp.maximum(
            jnp.dot(x, w1_ref[...], preferred_element_type=jnp.float32), 0.0)
        h = jnp.maximum(
            jnp.dot(h.astype(compute_dtype), w2_ref[...],
                    preferred_element_type=jnp.float32), 0.0)
        h = jnp.maximum(
            jnp.dot(h.astype(compute_dtype), w3_ref[...],
                    preferred_element_type=jnp.float32), 0.0)
        logits = jnp.dot(h.astype(compute_dtype), wl_ref[...],
                         preferred_element_type=jnp.float32)
        out_ref[pl.ds(r0, sub_rows), :] = logits.astype(out_ref.dtype)

    if n_sub == 1:
        chunk(0)
    else:
        def body(c, carry):
            chunk(c)
            return carry
        lax.fori_loop(0, n_sub, body, 0, unroll=unroll)


def prepare_mlp_params(w1, w2, w3, wl, *, compute_dtype=jnp.bfloat16,
                       lane_pad=_LANE):
    """One-time prep: transpose PyTorch [out,in] weights to [in,out], cast to
    the MXU operand dtype, and zero-pad BOTH the hidden dimension (50 -> 128)
    and the last layer's output columns to lane-dense widths. Zero padding is
    exact: padded hidden units stay 0 through ReLU and contribute nothing."""
    hid, num_in = w1.shape                       # PyTorch layout [out, in]
    num_out = wl.shape[0]
    hid_pad = _round_up(hid, lane_pad)
    n_pad = _round_up(num_out, lane_pad)

    w1t = jnp.zeros((num_in, hid_pad), compute_dtype)
    w1t = w1t.at[:, :hid].set(jnp.transpose(w1).astype(compute_dtype))
    w2t = jnp.zeros((hid_pad, hid_pad), compute_dtype)
    w2t = w2t.at[:hid, :hid].set(jnp.transpose(w2).astype(compute_dtype))
    w3t = jnp.zeros((hid_pad, hid_pad), compute_dtype)
    w3t = w3t.at[:hid, :hid].set(jnp.transpose(w3).astype(compute_dtype))
    wlt = jnp.zeros((hid_pad, n_pad), compute_dtype)
    wlt = wlt.at[:hid, :num_out].set(jnp.transpose(wl).astype(compute_dtype))
    return w1t, w2t, w3t, wlt


@functools.partial(jax.jit,
                   static_argnames=("num_out", "out_dtype", "return_padded"))
def mlp_forward(x, w1t, w2t, w3t, wlt, *, num_out, out_dtype=jnp.float32,
                return_padded=False):
    """x: [B, num_in] (bf16 recommended: halves the only large HBM read).
    w*t: prepared via prepare_mlp_params(). Returns [B, num_out] logits, or
    the padded [B_pad, 128] buffer if return_padded=True (avoids the post-call
    slice copy for consumers that can use it directly)."""
    B, num_in = x.shape
    hid_pad = w1t.shape[1]
    n_pad = wlt.shape[1]
    compute_dtype = w1t.dtype

    # ---- generation-aware tiling --------------------------------------
    kind = _device_kind()
    multi_tc = "v7" in kind                       # v7x: 2 TensorCores/chip
    vmem_limit = (48 << 20) if multi_tc else (100 << 20)

    # Per-row VMEM footprint: double-buffered x tile + out tile.
    per_row = 2 * (num_in * x.dtype.itemsize
                   + n_pad * jnp.dtype(out_dtype).itemsize)
    weight_bytes = 4 * hid_pad * hid_pad * jnp.dtype(compute_dtype).itemsize
    budget = int(vmem_limit * 0.75) - weight_bytes - (2 << 20)  # headroom
    max_tm = max(_ROW_ALIGN, (budget // per_row) // _ROW_ALIGN * _ROW_ALIGN)

    # 1 grid step on single-TC parts; 2 equal tiles on v7x (both TCs busy).
    base_tiles = 2 if (multi_tc and B > _ROW_ALIGN) else 1
    tm = _round_up(-(-B // base_tiles), _ROW_ALIGN)
    tm = min(tm, max_tm)

    # Keep f32 intermediates small for very large tiles via sub-chunking.
    if tm > _SUB_ROWS:
        tm = _round_up(tm, _SUB_ROWS)
        if tm > max_tm and max_tm >= _SUB_ROWS:
            tm = (max_tm // _SUB_ROWS) * _SUB_ROWS
        sub_rows, n_sub = _SUB_ROWS, tm // _SUB_ROWS
    else:
        sub_rows, n_sub = tm, 1
    unroll = n_sub <= 8

    n_tiles = -(-B // tm)
    if multi_tc and n_tiles % 2:
        n_tiles += 1                              # equal sharding across 2 TCs
    B_pad = n_tiles * tm
    if B_pad != B:
        x = jnp.pad(x, ((0, B_pad - B), (0, 0)))

    # ---- advisory cost estimate (logical, unpadded last layer) ---------
    flops = 2 * B_pad * (num_in * hid_pad + 2 * hid_pad * hid_pad
                         + hid_pad * num_out)
    bytes_accessed = (
        x.size * x.dtype.itemsize
        + (w1t.size + w2t.size + w3t.size + wlt.size) * w1t.dtype.itemsize
        + B_pad * n_pad * jnp.dtype(out_dtype).itemsize)
    cost = pl.CostEstimate(flops=flops, transcendentals=0,
                           bytes_accessed=bytes_accessed)

    kernel = functools.partial(_mlp_kernel, sub_rows=sub_rows, n_sub=n_sub,
                               compute_dtype=compute_dtype, unroll=unroll)

    out_padded = pl.pallas_call(
        kernel,
        out_shape=jax.ShapeDtypeStruct((B_pad, n_pad), out_dtype),
        grid_spec=pltpu.PrefetchScalarGridSpec(
            num_scalar_prefetch=0,
            grid=(n_tiles,),
            in_specs=[
                pl.BlockSpec((tm, num_in), lambda i: (i, 0)),       # x tile
                pl.BlockSpec((num_in, hid_pad), lambda i: (0, 0)),  # W1^T
                pl.BlockSpec((hid_pad, hid_pad), lambda i: (0, 0)), # W2^T
                pl.BlockSpec((hid_pad, hid_pad), lambda i: (0, 0)), # W3^T
                pl.BlockSpec((hid_pad, n_pad), lambda i: (0, 0)),   # Wlast^T
            ],
            out_specs=pl.BlockSpec((tm, n_pad), lambda i: (i, 0)),
        ),
        compiler_params=pltpu.CompilerParams(
            dimension_semantics=("parallel",),    # batch tiles shard across TCs
            vmem_limit_bytes=vmem_limit),
        cost_estimate=cost,
    )(x, w1t, w2t, w3t, wlt)

    if return_padded:
        return out_padded
    out = out_padded[:, :num_out]
    if B_pad != B:                                # skip row slice when possible
        out = out[:B]
    return out


def _init_linear_weight(key, num_out, num_in, dtype=jnp.float32):
    # PyTorch nn.Linear-like init: U(-1/sqrt(fan_in), 1/sqrt(fan_in)).
    bound = 1.0 / jnp.sqrt(jnp.array(num_in, dtype))
    return jax.random.uniform(key, (num_out, num_in), dtype,
                              minval=-bound, maxval=bound)


if __name__ == "__main__":
    # MLP(num_in=32, num_out=10), hidden=50 (fixed by the module). Small demo
    # batch; the wrapper auto-picks 1 tile on v5e/v6e and 2 equal tiles on v7x.
    num_in, num_out, hidden = 32, 10, 50
    batch = 64
    compute_dtype = jnp.bfloat16

    key = jax.random.PRNGKey(0)
    kx, k1, k2, k3, kl = jax.random.split(key, 5)

    x = jax.random.normal(kx, (batch, num_in), jnp.float32)
    w1 = _init_linear_weight(k1, hidden, num_in)    # fc1
    w2 = _init_linear_weight(k2, hidden, hidden)    # fc2
    w3 = _init_linear_weight(k3, hidden, hidden)    # fc3
    wl = _init_linear_weight(kl, num_out, hidden)   # last (no ReLU)

    # One-time param prep (transpose + bf16 cast + lane-dense 128 padding of
    # both the hidden dim and the output dim).
    w1t, w2t, w3t, wlt = prepare_mlp_params(
        w1, w2, w3, wl, compute_dtype=compute_dtype)

    # Ship x as bf16: halves the only large HBM read. num_in is NOT padded.
    x_in = x.astype(compute_dtype)

    logits = mlp_forward(x_in, w1t, w2t, w3t, wlt, num_out=num_out)
    logits = jax.block_until_ready(logits)
    assert logits.shape == (batch, num_out)

    # Reference 1: mimic the kernel's dtype path (bf16 operands, f32 accum).
    def ref_forward(xq):
        cd = compute_dtype
        relu = lambda a: jnp.maximum(a, 0.0)
        h = relu(jnp.dot(xq.astype(cd), w1.T.astype(cd),
                         preferred_element_type=jnp.float32))
        h = relu(jnp.dot(h.astype(cd), w2.T.astype(cd),
                         preferred_element_type=jnp.float32))
        h = relu(jnp.dot(h.astype(cd), w3.T.astype(cd),
                         preferred_element_type=jnp.float32))
        return jnp.dot(h.astype(cd), wl.T.astype(cd),
                       preferred_element_type=jnp.float32)

    ref = ref_forward(x_in)
    assert jnp.allclose(logits, ref, atol=1e-2, rtol=1e-2), \
        float(jnp.max(jnp.abs(logits - ref)))

    # Reference 2: pure-f32 PyTorch-semantics forward (loose bf16 tolerance).
    relu = lambda a: jnp.maximum(a, 0.0)
    ref_f32 = relu(x @ w1.T)
    ref_f32 = relu(ref_f32 @ w2.T)
    ref_f32 = relu(ref_f32 @ w3.T)
    ref_f32 = ref_f32 @ wl.T
    assert float(jnp.max(jnp.abs(logits - ref_f32))) < 0.25

    # TODO(synk): randomize()/post()/correction()/update() are training-time
    # autograd bookkeeping, not part of forward(); not implemented here.
    print("KERNEL_OK")
</pallas_src>

<mosaic_0001>
module attributes {stable_mosaic.version = 11 : i64} {
  func.func @_mlp_kernel(%arg0: i32, %arg1: memref<64x32xbf16, #tpu.memory_space<vmem>>, %arg2: memref<32x128xbf16, #tpu.memory_space<vmem>>, %arg3: memref<128x128xbf16, #tpu.memory_space<vmem>>, %arg4: memref<128x128xbf16, #tpu.memory_space<vmem>>, %arg5: memref<128x128xbf16, #tpu.memory_space<vmem>>, %arg6: memref<64x128xf32, #tpu.memory_space<vmem>>) attributes {dimension_semantics = [#tpu.dimension_semantics<parallel>], iteration_bounds = array<i64: 1>, scalar_prefetch = 0 : i64, scratch_operands = 0 : i64, tpu.core_type = #tpu.core_type<tc>, window_params = [{transform_indices = @transform_0, window_bounds = array<i64: 64, 32>}, {pipeline_mode = #tpu.pipeline_mode<synchronous>, transform_indices = @transform_1, window_bounds = array<i64: 32, 128>}, {pipeline_mode = #tpu.pipeline_mode<synchronous>, transform_indices = @transform_2, window_bounds = array<i64: 128, 128>}, {pipeline_mode = #tpu.pipeline_mode<synchronous>, transform_indices = @transform_3, window_bounds = array<i64: 128, 128>}, {pipeline_mode = #tpu.pipeline_mode<synchronous>, transform_indices = @transform_4, window_bounds = array<i64: 128, 128>}, {transform_indices = @transform_5, window_bounds = array<i64: 64, 128>}]} {
    %c0_i32 = arith.constant 0 : i32
    %0 = tpu.assume_multiple %c0_i32, 64 : i32
    %1 = arith.index_cast %0 : i32 to index
    %c0 = arith.constant 0 : index
    %2 = vector.load %arg1[%1, %c0] : memref<64x32xbf16, #tpu.memory_space<vmem>>, vector<64x32xbf16>
    %c0_0 = arith.constant 0 : index
    %c0_1 = arith.constant 0 : index
    %3 = vector.load %arg2[%c0_0, %c0_1] : memref<32x128xbf16, #tpu.memory_space<vmem>>, vector<32x128xbf16>
    %cst = arith.constant dense<0.000000e+00> : vector<64x128xf32>
    %4 = tpu.matmul %2, %3, %cst {dimension_numbers = #tpu.dot_dimension_numbers<[1], [0], [0], [1], [0, 0, 1, 1], [], []>} : vector<64x32xbf16>, vector<32x128xbf16>, vector<64x128xf32> -> vector<64x128xf32>
    %cst_2 = arith.constant 0.000000e+00 : f32
    %5 = vector.broadcast %cst_2 : f32 to vector<64x128xf32>
    %6 = arith.maximumf %4, %5 : vector<64x128xf32>
    %7 = arith.truncf %6 : vector<64x128xf32> to vector<64x128xbf16>
    %c0_3 = arith.constant 0 : index
    %c0_4 = arith.constant 0 : index
    %8 = vector.load %arg3[%c0_3, %c0_4] : memref<128x128xbf16, #tpu.memory_space<vmem>>, vector<128x128xbf16>
    %cst_5 = arith.constant dense<0.000000e+00> : vector<64x128xf32>
    %9 = tpu.matmul %7, %8, %cst_5 {dimension_numbers = #tpu.dot_dimension_numbers<[1], [0], [0], [1], [0, 0, 1, 1], [], []>} : vector<64x128xbf16>, vector<128x128xbf16>, vector<64x128xf32> -> vector<64x128xf32>
    %cst_6 = arith.constant 0.000000e+00 : f32
    %10 = vector.broadcast %cst_6 : f32 to vector<64x128xf32>
    %11 = arith.maximumf %9, %10 : vector<64x128xf32>
    %12 = arith.truncf %11 : vector<64x128xf32> to vector<64x128xbf16>
    %c0_7 = arith.constant 0 : index
    %c0_8 = arith.constant 0 : index
    %13 = vector.load %arg4[%c0_7, %c0_8] : memref<128x128xbf16, #tpu.memory_space<vmem>>, vector<128x128xbf16>
    %cst_9 = arith.constant dense<0.000000e+00> : vector<64x128xf32>
    %14 = tpu.matmul %12, %13, %cst_9 {dimension_numbers = #tpu.dot_dimension_numbers<[1], [0], [0], [1], [0, 0, 1, 1], [], []>} : vector<64x128xbf16>, vector<128x128xbf16>, vector<64x128xf32> -> vector<64x128xf32>
    %cst_10 = arith.constant 0.000000e+00 : f32
    %15 = vector.broadcast %cst_10 : f32 to vector<64x128xf32>
    %16 = arith.maximumf %14, %15 : vector<64x128xf32>
    %17 = arith.truncf %16 : vector<64x128xf32> to vector<64x128xbf16>
    %c0_11 = arith.constant 0 : index
    %c0_12 = arith.constant 0 : index
    %18 = vector.load %arg5[%c0_11, %c0_12] : memref<128x128xbf16, #tpu.memory_space<vmem>>, vector<128x128xbf16>
    %cst_13 = arith.constant dense<0.000000e+00> : vector<64x128xf32>
    %19 = tpu.matmul %17, %18, %cst_13 {dimension_numbers = #tpu.dot_dimension_numbers<[1], [0], [0], [1], [0, 0, 1, 1], [], []>} : vector<64x128xbf16>, vector<128x128xbf16>, vector<64x128xf32> -> vector<64x128xf32>
    %20 = arith.index_cast %0 : i32 to index
    %c0_14 = arith.constant 0 : index
    %21 = vector.load %arg6[%20, %c0_14] : memref<64x128xf32, #tpu.memory_space<vmem>>, vector<64x128xf32>
    tpu.vector_store %arg6[%20, %c0_14], %19 {strides = array<i32>} : memref<64x128xf32, #tpu.memory_space<vmem>>, vector<64x128xf32>,
    return
  }
  func.func @transform_0(%arg0: i32) -> (i32, i32) {
    %c0_i32 = arith.constant 0 : i32
    %c0_i32_0 = arith.constant 0 : i32
    return %arg0, %c0_i32 : i32, i32
  }
  func.func @transform_1(%arg0: i32) -> (i32, i32) {
    %c0_i32 = arith.constant 0 : i32
    %c0_i32_0 = arith.constant 0 : i32
    %c0_i32_1 = arith.constant 0 : i32
    return %c0_i32, %c0_i32_0 : i32, i32
  }
  func.func @transform_2(%arg0: i32) -> (i32, i32) {
    %c0_i32 = arith.constant 0 : i32
    %c0_i32_0 = arith.constant 0 : i32
    %c0_i32_1 = arith.constant 0 : i32
    return %c0_i32, %c0_i32_0 : i32, i32
  }
  func.func @transform_3(%arg0: i32) -> (i32, i32) {
    %c0_i32 = arith.constant 0 : i32
    %c0_i32_0 = arith.constant 0 : i32
    %c0_i32_1 = arith.constant 0 : i32
    return %c0_i32, %c0_i32_0 : i32, i32
  }
  func.func @transform_4(%arg0: i32) -> (i32, i32) {
    %c0_i32 = arith.constant 0 : i32
    %c0_i32_0 = arith.constant 0 : i32
    %c0_i32_1 = arith.constant 0 : i32
    return %c0_i32, %c0_i32_0 : i32, i32
  }
  func.func @transform_5(%arg0: i32) -> (i32, i32) {
    %c0_i32 = arith.constant 0 : i32
    %c0_i32_0 = arith.constant 0 : i32
    return %arg0, %c0_i32 : i32, i32
  }
}

</mosaic_0001>

<llo_original>
// kernel: mlp_forward.1
$region0: #{mlp_forward.1}
  #allocation0 [shape = 'u32[]', space=smem, size = 0x4, offset = 0x4, fixed_abs, tag = 'smem constant byte address 0x4 - core index']
  #allocation1 [shape = 'u32[144,128]{1,0:T(1,128)}', space=vmem, size = 0x12000, scoped, tag = 'internal scratch']
  %s0 = inlined_call_operand.hbm [shape: bf16[64,32], index: 0, kind: input, shape index: {}]
  %s1 = inlined_call_operand.hbm [shape: bf16[32,128], index: 1, kind: input, shape index: {}]
  %s2 = inlined_call_operand.hbm [shape: bf16[128,128], index: 2, kind: input, shape index: {}]
  %s3 = inlined_call_operand.hbm [shape: bf16[128,128], index: 3, kind: input, shape index: {}]
  %s4 = inlined_call_operand.hbm [shape: bf16[128,128], index: 4, kind: input, shape index: {}]
  %s5 = inlined_call_operand.hbm [shape: f32[64,128], index: 5, kind: output, shape index: {}]
  %s6 = sld [smem:[#allocation0]]
  $region50: #{mlp_forward.1} parent=0
    _
  %s8 = ssub.s32 1, %s6
  %s9 = scalar_select 0, %s8, %s6
  $region1: #{mlp_forward.1} parent=0
    #allocation2 [shape = 'u8[16384]{0}', space=vmem, size = 0x4000, scoped, tag = 'input window, operand 0, single buffered']
    #allocation3 [shape = 's32[1]{0}', space=sflag, size = 0x4, scoped, tag = 'scoped memory for mlp_forward.1']
    #allocation4 [shape = 's32[1]{0}', space=sflag, size = 0x4, scoped, tag = 'scoped memory for mlp_forward.1']
    #allocation5 [shape = 'u8[8192]{0}', space=vmem, size = 0x2000, scoped, tag = 'input window, operand 1, single buffered']
    #allocation6 [shape = 's32[1]{0}', space=sflag, size = 0x4, scoped, tag = 'scoped memory for mlp_forward.1']
    #allocation7 [shape = 'u8[32768]{0}', space=vmem, size = 0x8000, scoped, tag = 'input window, operand 2, single buffered']
    #allocation8 [shape = 'u8[32768]{0}', space=vmem, size = 0x8000, scoped, tag = 'input window, operand 3, single buffered']
    #allocation9 [shape = 's32[1]{0}', space=sflag, size = 0x4, scoped, tag = 'scoped memory for mlp_forward.1']
    #allocation10 [shape = 'u8[32768]{0}', space=vmem, size = 0x8000, scoped, tag = 'input window, operand 4, single buffered']
    #allocation11 [shape = 'u8[32768]{0}', space=vmem, size = 0x8000, scoped, tag = 'output window, operand 0, single buffered']
    %10 = vsyncpa [#allocation3], 0
    %11 = vsyncpa [#allocation6], 0
    %12 = vsyncpa [#allocation9], 0
    %13 = vsyncpa [#allocation4], 0
    // Predicated region
    $region2: #{mlp_forward.1} parent=1 // pred_check
      _
    $region3: #{mlp_forward.1} parent=1 // pred_check_branch
      %15 = sbr.rel (0) target = $region5
    $region4: #{mlp_forward.1} parent=1 // pred_region
      %s17 = ssub.s32 512, 512
      %18 = vsyncadd [#allocation3], %s17
      %s19 = sshll.u32 [#allocation2], 4
      %s20 = int_to_ptr.vmem [resolvable:$true] %s19
      %25 = dma.hbm_to_vmem [thread:$0]  %s0, 512, %s20, [#allocation3], 64, 64, 4
    $region5: #{mlp_forward.1} parent=1 // pred_fallthru
      _
    // Predicated region
    $region6: #{mlp_forward.1} parent=1 // pred_check
      _
    $region7: #{mlp_forward.1} parent=1 // pred_check_branch
      %27 = sbr.rel (0) target = $region9
    $region8: #{mlp_forward.1} parent=1 // pred_region
      %s29 = ssub.s32 256, 256
      %30 = vsyncadd [#allocation6], %s29
      %s31 = sshll.u32 [#allocation5], 4
      %s32 = int_to_ptr.vmem [resolvable:$true] %s31
      %37 = dma.hbm_to_vmem [thread:$0]  %s1, 256, %s32, [#allocation6], 64, 64, 4
    $region9: #{mlp_forward.1} parent=1 // pred_fallthru
      _
    // Predicated region
    $region10: #{mlp_forward.1} parent=1 // pred_check
      _
    $region11: #{mlp_forward.1} parent=1 // pred_check_branch
      %39 = sbr.rel (0) target = $region13
    $region12: #{mlp_forward.1} parent=1 // pred_region
      %s41 = ssub.s32 1024, 1024
      %42 = vsyncadd [#allocation6], %s41
      %s43 = sshll.u32 [#allocation7], 4
      %s44 = int_to_ptr.vmem [resolvable:$true] %s43
      %49 = dma.hbm_to_vmem [thread:$0]  %s2, 1024, %s44, [#allocation6], 64, 64, 4
    $region13: #{mlp_forward.1} parent=1 // pred_fallthru
      _
    // Predicated region
    $region14: #{mlp_forward.1} parent=1 // pred_check
      _
    $region15: #{mlp_forward.1} parent=1 // pred_check_branch
      %51 = sbr.rel (0) target = $region17
    $region16: #{mlp_forward.1} parent=1 // pred_region
      %s53 = ssub.s32 1024, 1024
      %54 = vsyncadd [#allocation9], %s53
      %s55 = sshll.u32 [#allocation8], 4
      %s56 = int_to_ptr.vmem [resolvable:$true] %s55
      %61 = dma.hbm_to_vmem [thread:$0]  %s3, 1024, %s56, [#allocation9], 64, 64, 4
    $region17: #{mlp_forward.1} parent=1 // pred_fallthru
      _
    // Predicated region
    $region18: #{mlp_forward.1} parent=1 // pred_check
      _
    $region19: #{mlp_forward.1} parent=1 // pred_check_branch
      %63 = sbr.rel (0) target = $region21
    $region20: #{mlp_forward.1} parent=1 // pred_region
      %s65 = ssub.s32 1024, 1024
      %66 = vsyncadd [#allocation9], %s65
      %s67 = sshll.u32 [#allocation10], 4
      %s68 = int_to_ptr.vmem [resolvable:$true] %s67
      %73 = dma.hbm_to_vmem [thread:$0]  %s4, 1024, %s68, [#allocation9], 64, 64, 4
    $region21: #{mlp_forward.1} parent=1 // pred_fallthru
      _
    // Predicated region
    $region22: #{mlp_forward.1} parent=1 // pred_check
      _
    $region23: #{mlp_forward.1} parent=1 // pred_check_branch
      %75 = sbr.rel (0) target = $region25
    $region24: #{mlp_forward.1} parent=1 // pred_region
      %76 = dma.done [#allocation3], 512
    $region25: #{mlp_forward.1} parent=1 // pred_fallthru
      _
    // Predicated region
    $region26: #{mlp_forward.1} parent=1 // pred_check
      _
    $region27: #{mlp_forward.1} parent=1 // pred_check_branch
      %78 = sbr.rel (0) target = $region29
    $region28: #{mlp_forward.1} parent=1 // pred_region
      %79 = dma.done [#allocation6], 256
    $region29: #{mlp_forward.1} parent=1 // pred_fallthru
      _
    // Predicated region
    $region30: #{mlp_forward.1} parent=1 // pred_check
      _
    $region31: #{mlp_forward.1} parent=1 // pred_check_branch
      %81 = sbr.rel (0) target = $region33
    $region32: #{mlp_forward.1} parent=1 // pred_region
      %82 = dma.done [#allocation6], 1024
    $region33: #{mlp_forward.1} parent=1 // pred_fallthru
      _
    // Predicated region
    $region34: #{mlp_forward.1} parent=1 // pred_check
      _
    $region35: #{mlp_forward.1} parent=1 // pred_check_branch
      %84 = sbr.rel (0) target = $region37
    $region36: #{mlp_forward.1} parent=1 // pred_region
      %85 = dma.done [#allocation9], 1024
    $region37: #{mlp_forward.1} parent=1 // pred_fallthru
      _
    // Predicated region
    $region38: #{mlp_forward.1} parent=1 // pred_check
      _
    $region39: #{mlp_forward.1} parent=1 // pred_check_branch
      %87 = sbr.rel (0) target = $region41
    $region40: #{mlp_forward.1} parent=1 // pred_region
      %88 = dma.done [#allocation9], 1024
    $region41: #{mlp_forward.1} parent=1 // pred_fallthru
      _
    %v90 = vld [vmem:[#allocation2] sm:$0xf]
    %v91 = vld [vmem:[#allocation2 + $0x4] sm:$0xf]
    %v92 = vld [vmem:[#allocation2 + $0x8] sm:$0xf]
    %v93 = vld [vmem:[#allocation2 + $0xc] sm:$0xf]
    %v94 = vld [vmem:[#allocation2 + $0x10] sm:$0xf]
    %v95 = vld [vmem:[#allocation2 + $0x14] sm:$0xf]
    %v96 = vld [vmem:[#allocation2 + $0x18] sm:$0xf]
    %v97 = vld [vmem:[#allocation2 + $0x1c] sm:$0xf]
    %v98 = vld [vmem:[#allocation5] sm:$0xf]
    %v99 = vld [vmem:[#allocation5 + $0x4] sm:$0xf]
    %v100 = vld [vmem:[#allocation5 + $0x8] sm:$0xf]
    %v101 = vld [vmem:[#allocation5 + $0xc] sm:$0xf]
    %v110 = vunpack.c.l.b16 %v90
    %v111 = vunpack.c.l.b16 %v91
    %v112 = vunpack.c.l.b16 %v92
    %v113 = vunpack.c.l.b16 %v93
    %v114 = vunpack.c.l.b16 %v94
    %v115 = vunpack.c.l.b16 %v95
    %v116 = vunpack.c.l.b16 %v96
    %v117 = vunpack.c.l.b16 %v97
    %v118 = vpack.c.b16 %v111, %v110
    %v119 = vpack.c.b16 %v113, %v112
    %v120 = vpack.c.b16 %v115, %v114
    %v121 = vpack.c.b16 %v117, %v116
    %v126 = vunpack.c.l.b16 %v98
    %v127 = vunpack.c.l.b16 %v99
    %v128 = vunpack.c.l.b16 %v100
    %v129 = vunpack.c.l.b16 %v101
    %v130 = vpack.c.b16 %v127, %v126
    %v131 = vpack.c.b16 %v129, %v128
    %vm134 = vcmask 261120
    %v136 = vsel %vm134, %v118, 0
    %v139 = vsel %vm134, %v119, 0
    %v142 = vsel %vm134, %v120, 0
    %v145 = vsel %vm134, %v121, 0
    %147 = vmatprep.subr.bf16.mxu0 0
    %148 = vmatpush1.bf16.msra.mxu0 %v130
    %149 = vmatprep.subr.bf16.mxu0 0
    %150 = vmatpush1.bf16.msra.mxu0 %v131
    %151 = vmatprep.subr.bf16.mxu0 0
    %152 = vmatpush1.bf16.msra.mxu0 0
    %153 = vmatprep.subr.bf16.mxu0 0
    %154 = vmatpush1.bf16.msra.mxu0 0
    %155 = vmatprep.subr.bf16.mxu0 0
    %156 = vmatpush1.bf16.msra.mxu0 0
    %157 = vmatprep.subr.bf16.mxu0 0
    %158 = vmatpush1.bf16.msra.mxu0 0
    %159 = vmatprep.subr.bf16.mxu0 0
    %160 = vmatpush1.bf16.msra.mxu0 0
    %161 = vmatprep.subr.bf16.mxu0 0
    %162 = vmatpush1.bf16.msra.mxu0 0
    %163 = vmatprep.subr.bf16.mxu0 0
    %164 = vmatpush1.bf16.msra.mxu0 0
    %165 = vmatprep.subr.bf16.mxu0 0
    %166 = vmatpush1.bf16.msra.mxu0 0
    %167 = vmatprep.subr.bf16.mxu0 0
    %168 = vmatpush1.bf16.msra.mxu0 0
    %169 = vmatprep.subr.bf16.mxu0 0
    %170 = vmatpush1.bf16.msra.mxu0 0
    %171 = vmatprep.subr.bf16.mxu0 0
    %172 = vmatpush1.bf16.msra.mxu0 0
    %173 = vmatprep.subr.bf16.mxu0 0
    %174 = vmatpush1.bf16.msra.mxu0 0
    %175 = vmatprep.subr.bf16.mxu0 0
    %176 = vmatpush1.bf16.msra.mxu0 0
    %177 = vmatprep.subr.bf16.mxu0 0
    %178 = vmatpush1.bf16.msra.mxu0 0
    %179 = vmatprep.mubr.bf16.mxu0 0
    %180 = vmatmul.mubr.bf16.gmra.mrb[0].mxu0 %v136
    %v181 = vpop.f32.mrb[0].mxu0
    %v182 = vadd.f32 0.0, %v181
    %v183 = vpop.f32.mrb[0].mxu0
    %v184 = vpop.f32.mrb[0].mxu0
    %v185 = vadd.f32 0.0, %v184
    %v186 = vpop.f32.mrb[0].mxu0
    %187 = vmatprep.mubr.bf16.mxu0 0
    %188 = vmatmul.mubr.bf16.gmra.mrb[0].mxu0 %v139
    %v189 = vpop.f32.mrb[0].mxu0
    %v190 = vadd.f32 0.0, %v189
    %v191 = vpop.f32.mrb[0].mxu0
    %v192 = vpop.f32.mrb[0].mxu0
    %v193 = vadd.f32 0.0, %v192
    %v194 = vpop.f32.mrb[0].mxu0
    %195 = vmatprep.mubr.bf16.mxu0 0
    %196 = vmatmul.mubr.bf16.gmra.mrb[0].mxu0 %v142
    %v197 = vpop.f32.mrb[0].mxu0
    %v198 = vadd.f32 0.0, %v197
    %v199 = vpop.f32.mrb[0].mxu0
    %v200 = vpop.f32.mrb[0].mxu0
    %v201 = vadd.f32 0.0, %v200
    %v202 = vpop.f32.mrb[0].mxu0
    %203 = vmatprep.mubr.bf16.mxu0 0
    %204 = vmatmul.mubr.bf16.gmra.mrb[0].mxu0 %v145
    %v205 = vpop.f32.mrb[0].mxu0
    %v206 = vadd.f32 0.0, %v205
    %v207 = vpop.f32.mrb[0].mxu0
    %v208 = vpop.f32.mrb[0].mxu0
    %v209 = vadd.f32 0.0, %v208
    %v210 = vpop.f32.mrb[0].mxu0
    %211 = vdwg.mxu0
    %v212 = vmax.f32 %v182, 0.0
    %v213 = vmax.f32 %v185, 0.0
    %v214 = vmax.f32 %v190, 0.0
    %v215 = vmax.f32 %v193, 0.0
    %v216 = vmax.f32 %v198, 0.0
    %v217 = vmax.f32 %v201, 0.0
    %v218 = vmax.f32 %v206, 0.0
    %v219 = vmax.f32 %v209, 0.0
    %v220 = vpack.c.bf16 %v213, %v212
    %v221 = vpack.c.bf16 %v215, %v214
    %v222 = vpack.c.bf16 %v217, %v216
    %v223 = vpack.c.bf16 %v219, %v218
    %v224 = vld [vmem:[#allocation7] sm:$0xf]
    %v225 = vld [vmem:[#allocation7 + $0x4] sm:$0xf]
    %v226 = vld [vmem:[#allocation7 + $0x8] sm:$0xf]
    %v227 = vld [vmem:[#allocation7 + $0xc] sm:$0xf]
    %v228 = vld [vmem:[#allocation7 + $0x10] sm:$0xf]
    %v229 = vld [vmem:[#allocation7 + $0x14] sm:$0xf]
    %v230 = vld [vmem:[#allocation7 + $0x18] sm:$0xf]
    %v231 = vld [vmem:[#allocation7 + $0x1c] sm:$0xf]
    %v232 = vld [vmem:[#allocation7 + $0x20] sm:$0xf]
    %v233 = vld [vmem:[#allocation7 + $0x24] sm:$0xf]
    %v234 = vld [vmem:[#allocation7 + $0x28] sm:$0xf]
    %v235 = vld [vmem:[#allocation7 + $0x2c] sm:$0xf]
    %v236 = vld [vmem:[#allocation7 + $0x30] sm:$0xf]
    %v237 = vld [vmem:[#allocation7 + $0x34] sm:$0xf]
    %v238 = vld [vmem:[#allocation7 + $0x38] sm:$0xf]
    %v239 = vld [vmem:[#allocation7 + $0x3c] sm:$0xf]
    %v256 = vunpack.c.l.b16 %v224
    %v257 = vunpack.c.l.b16 %v225
    %v258 = vunpack.c.l.b16 %v226
    %v259 = vunpack.c.l.b16 %v227
    %v260 = vunpack.c.l.b16 %v228
    %v261 = vunpack.c.l.b16 %v229
    %v262 = vunpack.c.l.b16 %v230
    %v263 = vunpack.c.l.b16 %v231
    %v264 = vunpack.c.l.b16 %v232
    %v265 = vunpack.c.l.b16 %v233
    %v266 = vunpack.c.l.b16 %v234
    %v267 = vunpack.c.l.b16 %v235
    %v268 = vunpack.c.l.b16 %v236
    %v269 = vunpack.c.l.b16 %v237
    %v270 = vunpack.c.l.b16 %v238
    %v271 = vunpack.c.l.b16 %v239
    %v272 = vpack.c.b16 %v257, %v256
    %v273 = vpack.c.b16 %v259, %v258
    %v274 = vpack.c.b16 %v261, %v260
    %v275 = vpack.c.b16 %v263, %v262
    %v276 = vpack.c.b16 %v265, %v264
    %v277 = vpack.c.b16 %v267, %v266
    %v278 = vpack.c.b16 %v269, %v268
    %v279 = vpack.c.b16 %v271, %v270
    %288 = vmatprep.subr.bf16.mxu0 0
    %289 = vmatpush1.bf16.msra.mxu0 %v272
    %290 = vmatprep.subr.bf16.mxu0 0
    %291 = vmatpush1.bf16.msra.mxu0 %v273
    %292 = vmatprep.subr.bf16.mxu0 0
    %293 = vmatpush1.bf16.msra.mxu0 %v274
    %294 = vmatprep.subr.bf16.mxu0 0
    %295 = vmatpush1.bf16.msra.mxu0 %v275
    %296 = vmatprep.subr.bf16.mxu0 0
    %297 = vmatpush1.bf16.msra.mxu0 %v276
    %298 = vmatprep.subr.bf16.mxu0 0
    %299 = vmatpush1.bf16.msra.mxu0 %v277
    %300 = vmatprep.subr.bf16.mxu0 0
    %301 = vmatpush1.bf16.msra.mxu0 %v278
    %302 = vmatprep.subr.bf16.mxu0 0
    %303 = vmatpush1.bf16.msra.mxu0 %v279
    %304 = vmatprep.subr.bf16.mxu0 0
    %305 = vmatpush1.bf16.msra.mxu0 0
    %306 = vmatprep.subr.bf16.mxu0 0
    %307 = vmatpush1.bf16.msra.mxu0 0
    %308 = vmatprep.subr.bf16.mxu0 0
    %309 = vmatpush1.bf16.msra.mxu0 0
    %310 = vmatprep.subr.bf16.mxu0 0
    %311 = vmatpush1.bf16.msra.mxu0 0
    %312 = vmatprep.subr.bf16.mxu0 0
    %313 = vmatpush1.bf16.msra.mxu0 0
    %314 = vmatprep.subr.bf16.mxu0 0
    %315 = vmatpush1.bf16.msra.mxu0 0
    %316 = vmatprep.subr.bf16.mxu0 0
    %317 = vmatpush1.bf16.msra.mxu0 0
    %318 = vmatprep.subr.bf16.mxu0 0
    %319 = vmatpush1.bf16.msra.mxu0 0
    %320 = vmatprep.mubr.bf16.mxu0 0
    %321 = vmatmul.mubr.bf16.gmra.mrb[0].mxu0 %v220
    %v322 = vpop.f32.mrb[0].mxu0
    %v323 = vadd.f32 0.0, %v322
    %v324 = vpop.f32.mrb[0].mxu0
    %v325 = vpop.f32.mrb[0].mxu0
    %v326 = vadd.f32 0.0, %v325
    %v327 = vpop.f32.mrb[0].mxu0
    %328 = vmatprep.mubr.bf16.mxu0 0
    %329 = vmatmul.mubr.bf16.gmra.mrb[0].mxu0 %v221
    %v330 = vpop.f32.mrb[0].mxu0
    %v331 = vadd.f32 0.0, %v330
    %v332 = vpop.f32.mrb[0].mxu0
    %v333 = vpop.f32.mrb[0].mxu0
    %v334 = vadd.f32 0.0, %v333
    %v335 = vpop.f32.mrb[0].mxu0
    %336 = vmatprep.mubr.bf16.mxu0 0
    %337 = vmatmul.mubr.bf16.gmra.mrb[0].mxu0 %v222
    %v338 = vpop.f32.mrb[0].mxu0
    %v339 = vadd.f32 0.0, %v338
    %v340 = vpop.f32.mrb[0].mxu0
    %v341 = vpop.f32.mrb[0].mxu0
    %v342 = vadd.f32 0.0, %v341
    %v343 = vpop.f32.mrb[0].mxu0
    %344 = vmatprep.mubr.bf16.mxu0 0
    %345 = vmatmul.mubr.bf16.gmra.mrb[0].mxu0 %v223
    %v346 = vpop.f32.mrb[0].mxu0
    %v347 = vadd.f32 0.0, %v346
    %v348 = vpop.f32.mrb[0].mxu0
    %v349 = vpop.f32.mrb[0].mxu0
    %v350 = vadd.f32 0.0, %v349
    %v351 = vpop.f32.mrb[0].mxu0
    %352 = vdwg.mxu0
    %v353 = vmax.f32 %v323, 0.0
    %v354 = vmax.f32 %v326, 0.0
    %v355 = vmax.f32 %v331, 0.0
    %v356 = vmax.f32 %v334, 0.0
    %v357 = vmax.f32 %v339, 0.0
    %v358 = vmax.f32 %v342, 0.0
    %v359 = vmax.f32 %v347, 0.0
    %v360 = vmax.f32 %v350, 0.0
    %v361 = vpack.c.bf16 %v354, %v353
    %v362 = vpack.c.bf16 %v356, %v355
    %v363 = vpack.c.bf16 %v358, %v357
    %v364 = vpack.c.bf16 %v360, %v359
    %v365 = vld [vmem:[#allocation8] sm:$0xf]
    %v366 = vld [vmem:[#allocation8 + $0x4] sm:$0xf]
    %v367 = vld [vmem:[#allocation8 + $0x8] sm:$0xf]
    %v368 = vld [vmem:[#allocation8 + $0xc] sm:$0xf]
    %v369 = vld [vmem:[#allocation8 + $0x10] sm:$0xf]
    %v370 = vld [vmem:[#allocation8 + $0x14] sm:$0xf]
    %v371 = vld [vmem:[#allocation8 + $0x18] sm:$0xf]
    %v372 = vld [vmem:[#allocation8 + $0x1c] sm:$0xf]
    %v373 = vld [vmem:[#allocation8 + $0x20] sm:$0xf]
    %v374 = vld [vmem:[#allocation8 + $0x24] sm:$0xf]
    %v375 = vld [vmem:[#allocation8 + $0x28] sm:$0xf]
    %v376 = vld [vmem:[#allocation8 + $0x2c] sm:$0xf]
    %v377 = vld [vmem:[#allocation8 + $0x30] sm:$0xf]
    %v378 = vld [vmem:[#allocation8 + $0x34] sm:$0xf]
    %v379 = vld [vmem:[#allocation8 + $0x38] sm:$0xf]
    %v380 = vld [vmem:[#allocation8 + $0x3c] sm:$0xf]
    %v397 = vunpack.c.l.b16 %v365
    %v398 = vunpack.c.l.b16 %v366
    %v399 = vunpack.c.l.b16 %v367
    %v400 = vunpack.c.l.b16 %v368
    %v401 = vunpack.c.l.b16 %v369
    %v402 = vunpack.c.l.b16 %v370
    %v403 = vunpack.c.l.b16 %v371
    %v404 = vunpack.c.l.b16 %v372
    %v405 = vunpack.c.l.b16 %v373
    %v406 = vunpack.c.l.b16 %v374
    %v407 = vunpack.c.l.b16 %v375
    %v408 = vunpack.c.l.b16 %v376
    %v409 = vunpack.c.l.b16 %v377
    %v410 = vunpack.c.l.b16 %v378
    %v411 = vunpack.c.l.b16 %v379
    %v412 = vunpack.c.l.b16 %v380
    %v413 = vpack.c.b16 %v398, %v397
    %v414 = vpack.c.b16 %v400, %v399
    %v415 = vpack.c.b16 %v402, %v401
    %v416 = vpack.c.b16 %v404, %v403
    %v417 = vpack.c.b16 %v406, %v405
    %v418 = vpack.c.b16 %v408, %v407
    %v419 = vpack.c.b16 %v410, %v409
    %v420 = vpack.c.b16 %v412, %v411
    %429 = vmatprep.subr.bf16.mxu0 0
    %430 = vmatpush1.bf16.msra.mxu0 %v413
    %431 = vmatprep.subr.bf16.mxu0 0
    %432 = vmatpush1.bf16.msra.mxu0 %v414
    %433 = vmatprep.subr.bf16.mxu0 0
    %434 = vmatpush1.bf16.msra.mxu0 %v415
    %435 = vmatprep.subr.bf16.mxu0 0
    %436 = vmatpush1.bf16.msra.mxu0 %v416
    %437 = vmatprep.subr.bf16.mxu0 0
    %438 = vmatpush1.bf16.msra.mxu0 %v417
    %439 = vmatprep.subr.bf16.mxu0 0
    %440 = vmatpush1.bf16.msra.mxu0 %v418
    %441 = vmatprep.subr.bf16.mxu0 0
    %442 = vmatpush1.bf16.msra.mxu0 %v419
    %443 = vmatprep.subr.bf16.mxu0 0
    %444 = vmatpush1.bf16.msra.mxu0 %v420
    %445 = vmatprep.subr.bf16.mxu0 0
    %446 = vmatpush1.bf16.msra.mxu0 0
    %447 = vmatprep.subr.bf16.mxu0 0
    %448 = vmatpush1.bf16.msra.mxu0 0
    %449 = vmatprep.subr.bf16.mxu0 0
    %450 = vmatpush1.bf16.msra.mxu0 0
    %451 = vmatprep.subr.bf16.mxu0 0
    %452 = vmatpush1.bf16.msra.mxu0 0
    %453 = vmatprep.subr.bf16.mxu0 0
    %454 = vmatpush1.bf16.msra.mxu0 0
    %455 = vmatprep.subr.bf16.mxu0 0
    %456 = vmatpush1.bf16.msra.mxu0 0
    %457 = vmatprep.subr.bf16.mxu0 0
    %458 = vmatpush1.bf16.msra.mxu0 0
    %459 = vmatprep.subr.bf16.mxu0 0
    %460 = vmatpush1.bf16.msra.mxu0 0
    %461 = vmatprep.mubr.bf16.mxu0 0
    %462 = vmatmul.mubr.bf16.gmra.mrb[0].mxu0 %v361
    %v463 = vpop.f32.mrb[0].mxu0
    %v464 = vadd.f32 0.0, %v463
    %v465 = vpop.f32.mrb[0].mxu0
    %v466 = vpop.f32.mrb[0].mxu0
    %v467 = vadd.f32 0.0, %v466
    %v468 = vpop.f32.mrb[0].mxu0
    %469 = vmatprep.mubr.bf16.mxu0 0
    %470 = vmatmul.mubr.bf16.gmra.mrb[0].mxu0 %v362
    %v471 = vpop.f32.mrb[0].mxu0
    %v472 = vadd.f32 0.0, %v471
    %v473 = vpop.f32.mrb[0].mxu0
    %v474 = vpop.f32.mrb[0].mxu0
    %v475 = vadd.f32 0.0, %v474
    %v476 = vpop.f32.mrb[0].mxu0
    %477 = vmatprep.mubr.bf16.mxu0 0
    %478 = vmatmul.mubr.bf16.gmra.mrb[0].mxu0 %v363
    %v479 = vpop.f32.mrb[0].mxu0
    %v480 = vadd.f32 0.0, %v479
    %v481 = vpop.f32.mrb[0].mxu0
    %v482 = vpop.f32.mrb[0].mxu0
    %v483 = vadd.f32 0.0, %v482
    %v484 = vpop.f32.mrb[0].mxu0
    %485 = vmatprep.mubr.bf16.mxu0 0
    %486 = vmatmul.mubr.bf16.gmra.mrb[0].mxu0 %v364
    %v487 = vpop.f32.mrb[0].mxu0
    %v488 = vadd.f32 0.0, %v487
    %v489 = vpop.f32.mrb[0].mxu0
    %v490 = vpop.f32.mrb[0].mxu0
    %v491 = vadd.f32 0.0, %v490
    %v492 = vpop.f32.mrb[0].mxu0
    %493 = vdwg.mxu0
    %v494 = vmax.f32 %v464, 0.0
    %v495 = vmax.f32 %v467, 0.0
    %v496 = vmax.f32 %v472, 0.0
    %v497 = vmax.f32 %v475, 0.0
    %v498 = vmax.f32 %v480, 0.0
    %v499 = vmax.f32 %v483, 0.0
    %v500 = vmax.f32 %v488, 0.0
    %v501 = vmax.f32 %v491, 0.0
    %v502 = vpack.c.bf16 %v495, %v494
    %v503 = vpack.c.bf16 %v497, %v496
    %v504 = vpack.c.bf16 %v499, %v498
    %v505 = vpack.c.bf16 %v501, %v500
    %v506 = vld [vmem:[#allocation10] sm:$0xf]
    %v507 = vld [vmem:[#allocation10 + $0x4] sm:$0xf]
    %v508 = vld [vmem:[#allocation10 + $0x8] sm:$0xf]
    %v509 = vld [vmem:[#allocation10 + $0xc] sm:$0xf]
    %v510 = vld [vmem:[#allocation10 + $0x10] sm:$0xf]
    %v511 = vld [vmem:[#allocation10 + $0x14] sm:$0xf]
    %v512 = vld [vmem:[#allocation10 + $0x18] sm:$0xf]
    %v513 = vld [vmem:[#allocation10 + $0x1c] sm:$0xf]
    %v514 = vld [vmem:[#allocation10 + $0x20] sm:$0xf]
    %v515 = vld [vmem:[#allocation10 + $0x24] sm:$0xf]
    %v516 = vld [vmem:[#allocation10 + $0x28] sm:$0xf]
    %v517 = vld [vmem:[#allocation10 + $0x2c] sm:$0xf]
    %v518 = vld [vmem:[#allocation10 + $0x30] sm:$0xf]
    %v519 = vld [vmem:[#allocation10 + $0x34] sm:$0xf]
    %v520 = vld [vmem:[#allocation10 + $0x38] sm:$0xf]
    %v521 = vld [vmem:[#allocation10 + $0x3c] sm:$0xf]
    %v538 = vunpack.c.l.b16 %v506
    %v539 = vunpack.c.l.b16 %v507
    %v540 = vunpack.c.l.b16 %v508
    %v541 = vunpack.c.l.b16 %v509
    %v542 = vunpack.c.l.b16 %v510
    %v543 = vunpack.c.l.b16 %v511
    %v544 = vunpack.c.l.b16 %v512
    %v545 = vunpack.c.l.b16 %v513
    %v546 = vunpack.c.l.b16 %v514
    %v547 = vunpack.c.l.b16 %v515
    %v548 = vunpack.c.l.b16 %v516
    %v549 = vunpack.c.l.b16 %v517
    %v550 = vunpack.c.l.b16 %v518
    %v551 = vunpack.c.l.b16 %v519
    %v552 = vunpack.c.l.b16 %v520
    %v553 = vunpack.c.l.b16 %v521
    %v554 = vpack.c.b16 %v539, %v538
    %v555 = vpack.c.b16 %v541, %v540
    %v556 = vpack.c.b16 %v543, %v542
    %v557 = vpack.c.b16 %v545, %v544
    %v558 = vpack.c.b16 %v547, %v546
    %v559 = vpack.c.b16 %v549, %v548
    %v560 = vpack.c.b16 %v551, %v550
    %v561 = vpack.c.b16 %v553, %v552
    %570 = vmatprep.subr.bf16.mxu0 0
    %571 = vmatpush1.bf16.msra.mxu0 %v554
    %572 = vmatprep.subr.bf16.mxu0 0
    %573 = vmatpush1.bf16.msra.mxu0 %v555
    %574 = vmatprep.subr.bf16.mxu0 0
    %575 = vmatpush1.bf16.msra.mxu0 %v556
    %576 = vmatprep.subr.bf16.mxu0 0
    %577 = vmatpush1.bf16.msra.mxu0 %v557
    %578 = vmatprep.subr.bf16.mxu0 0
    %579 = vmatpush1.bf16.msra.mxu0 %v558
    %580 = vmatprep.subr.bf16.mxu0 0
    %581 = vmatpush1.bf16.msra.mxu0 %v559
    %582 = vmatprep.subr.bf16.mxu0 0
    %583 = vmatpush1.bf16.msra.mxu0 %v560
    %584 = vmatprep.subr.bf16.mxu0 0
    %585 = vmatpush1.bf16.msra.mxu0 %v561
    %586 = vmatprep.subr.bf16.mxu0 0
    %587 = vmatpush1.bf16.msra.mxu0 0
    %588 = vmatprep.subr.bf16.mxu0 0
    %589 = vmatpush1.bf16.msra.mxu0 0
    %590 = vmatprep.subr.bf16.mxu0 0
    %591 = vmatpush1.bf16.msra.mxu0 0
    %592 = vmatprep.subr.bf16.mxu0 0
    %593 = vmatpush1.bf16.msra.mxu0 0
    %594 = vmatprep.subr.bf16.mxu0 0
    %595 = vmatpush1.bf16.msra.mxu0 0
    %596 = vmatprep.subr.bf16.mxu0 0
    %597 = vmatpush1.bf16.msra.mxu0 0
    %598 = vmatprep.subr.bf16.mxu0 0
    %599 = vmatpush1.bf16.msra.mxu0 0
    %600 = vmatprep.subr.bf16.mxu0 0
    %601 = vmatpush1.bf16.msra.mxu0 0
    %602 = vmatprep.mubr.bf16.mxu0 0
    %603 = vmatmul.mubr.bf16.gmra.mrb[0].mxu0 %v502
    %v604 = vpop.f32.mrb[0].mxu0
    %v605 = vadd.f32 0.0, %v604
    %v606 = vpop.f32.mrb[0].mxu0
    %v607 = vpop.f32.mrb[0].mxu0
    %v608 = vadd.f32 0.0, %v607
    %v609 = vpop.f32.mrb[0].mxu0
    %610 = vmatprep.mubr.bf16.mxu0 0
    %611 = vmatmul.mubr.bf16.gmra.mrb[0].mxu0 %v503
    %v612 = vpop.f32.mrb[0].mxu0
    %v613 = vadd.f32 0.0, %v612
    %v614 = vpop.f32.mrb[0].mxu0
    %v615 = vpop.f32.mrb[0].mxu0
    %v616 = vadd.f32 0.0, %v615
    %v617 = vpop.f32.mrb[0].mxu0
    %618 = vmatprep.mubr.bf16.mxu0 0
    %619 = vmatmul.mubr.bf16.gmra.mrb[0].mxu0 %v504
    %v620 = vpop.f32.mrb[0].mxu0
    %v621 = vadd.f32 0.0, %v620
    %v622 = vpop.f32.mrb[0].mxu0
    %v623 = vpop.f32.mrb[0].mxu0
    %v624 = vadd.f32 0.0, %v623
    %v625 = vpop.f32.mrb[0].mxu0
    %626 = vmatprep.mubr.bf16.mxu0 0
    %627 = vmatmul.mubr.bf16.gmra.mrb[0].mxu0 %v505
    %v628 = vpop.f32.mrb[0].mxu0
    %v629 = vadd.f32 0.0, %v628
    %v630 = vpop.f32.mrb[0].mxu0
    %v631 = vpop.f32.mrb[0].mxu0
    %v632 = vadd.f32 0.0, %v631
    %v633 = vpop.f32.mrb[0].mxu0
    %634 = vdwg.mxu0
    %635 = vst [vmem:[#allocation11] sm:$0xff] %v605
    %636 = vst [vmem:[#allocation11 + $0x8] sm:$0xff] %v608
    %637 = vst [vmem:[#allocation11 + $0x10] sm:$0xff] %v613
    %638 = vst [vmem:[#allocation11 + $0x18] sm:$0xff] %v616
    %639 = vst [vmem:[#allocation11 + $0x20] sm:$0xff] %v621
    %640 = vst [vmem:[#allocation11 + $0x28] sm:$0xff] %v624
    %641 = vst [vmem:[#allocation11 + $0x30] sm:$0xff] %v629
    %642 = vst [vmem:[#allocation11 + $0x38] sm:$0xff] %v632
    // Predicated region
    $region42: #{mlp_forward.1} parent=1 // pred_check
      _
    $region43: #{mlp_forward.1} parent=1 // pred_check_branch
      %644 = sbr.rel (0) target = $region45
    $region44: #{mlp_forward.1} parent=1 // pred_region
      %s646 = ssub.s32 1024, 1024
      %647 = vsyncadd [#allocation4], %s646
      %s648 = sshll.u32 [#allocation11], 4
      %s649 = int_to_ptr.vmem [resolvable:$true] %s648
      %654 = dma.vmem_to_hbm [thread:$0]  %s649, 1024, %s5, [#allocation4], 128, 128, 8
    $region45: #{mlp_forward.1} parent=1 // pred_fallthru
      _
    // Predicated region
    $region46: #{mlp_forward.1} parent=1 // pred_check
      _
    $region47: #{mlp_forward.1} parent=1 // pred_check_branch
      %656 = sbr.rel (0) target = $region49
    $region48: #{mlp_forward.1} parent=1 // pred_region
      %657 = dma.done [#allocation4], 1024
    $region49: #{mlp_forward.1} parent=1 // pred_fallthru
      _
    %658 = vsyncpa [#allocation3], 1
    %659 = vsyncpa [#allocation6], 1
    %660 = vsyncpa [#allocation9], 1
    %661 = vsyncpa [#allocation4], 1

</llo_original>
